<compile_context>
chip_gen: v7x
topology: tpu7x:2x2x1
jax: 0.10.0
libtpu: 0.0.40
codegen_flags: <defaults>
</compile_context>

<pallas_src>
import functools

import jax
import jax.numpy as jnp
from jax.experimental import pallas as pl
from jax.experimental.pallas import tpu as pltpu


# ----------------------------------------------------------------------------
# Kernels
# ----------------------------------------------------------------------------
def _ctc_head_kernel(x_ref, w_ref, b_ref, o_ref):
    """Single-linear CTC head: (x @ W + b) then log_softmax over the lane dim."""
    logits = jnp.dot(x_ref[...], w_ref[...], preferred_element_type=jnp.float32)
    logits = logits + b_ref[...]                       # (tm, Npad) + (1, Npad)
    m = jnp.max(logits, axis=-1, keepdims=True)        # XLU row max
    lse = m + jnp.log(jnp.sum(jnp.exp(logits - m), axis=-1, keepdims=True))
    n_store = o_ref.shape[-1]                          # may drop padded columns
    o_ref[...] = (logits[:, :n_store] - lse).astype(o_ref.dtype)


def _ctc_head_mid_kernel(x_ref, w1_ref, b1_ref, w2_ref, b2_ref, o_ref):
    """Two-linear CTC head (mid_channels path) fused with log_softmax."""
    h = jnp.dot(x_ref[...], w1_ref[...], preferred_element_type=jnp.float32)
    h = h + b1_ref[...]
    logits = jnp.dot(h.astype(w2_ref.dtype), w2_ref[...],
                     preferred_element_type=jnp.float32)
    logits = logits + b2_ref[...]
    m = jnp.max(logits, axis=-1, keepdims=True)
    lse = m + jnp.log(jnp.sum(jnp.exp(logits - m), axis=-1, keepdims=True))
    n_store = o_ref.shape[-1]
    o_ref[...] = (logits[:, :n_store] - lse).astype(o_ref.dtype)


# ----------------------------------------------------------------------------
# Helpers
# ----------------------------------------------------------------------------
def _round_up(x, m):
    return ((x + m - 1) // m) * m


def _pad_out_cols(w, b):
    """Pad the output (lane) dim of (w, b) up to a multiple of 128.

    Padded weight columns are zero and padded bias entries are -1e30 (bias is
    kept in f32 -- do NOT cast it to bf16, the constant would saturate), so the
    padded logits underflow to 0 in the softmax denominator."""
    n = w.shape[1]
    n_pad = _round_up(n, 128)
    if n_pad != n:
        w = jnp.pad(w, ((0, 0), (0, n_pad - n)))
        b = jnp.pad(b, (0, n_pad - n), constant_values=-1e30)
    return w, b.reshape(1, n_pad)


def _pad_mid_dim(w1, b1, w2):
    """Pad the hidden (mid) dim to a multiple of 128 with zeros.

    Zero w1 columns + zero b1 entries give zero hidden activations in the pad,
    and zero w2 rows make their contribution to the logits exactly zero."""
    m = w1.shape[1]
    m_pad = _round_up(m, 128)
    if m_pad != m:
        w1 = jnp.pad(w1, ((0, 0), (0, m_pad - m)))
        b1 = jnp.pad(b1, (0, m_pad - m))
        w2 = jnp.pad(w2, ((0, m_pad - m), (0, 0)))
    return w1, b1.reshape(1, m_pad), w2


def _vmem_budget_bytes():
    """~85% of this device's VMEM (per TensorCore); conservative fallback."""
    try:
        cap = int(pltpu.get_tpu_info().vmem_capacity_bytes)
    except Exception:
        cap = 64 << 20      # assume the smallest generation (v7x per-TC VMEM)
    return int(0.85 * cap)


@functools.lru_cache(maxsize=None)
def _single_buffer_supported():
    """Probe once whether pipeline_mode=pl.Buffered(1) lowers on this backend."""
    if not hasattr(pl, "Buffered"):
        return False

    def _probe_kernel(x_ref, w_ref, o_ref):
        o_ref[...] = x_ref[...] + w_ref[...]

    try:
        x = jnp.zeros((16, 128), jnp.float32)
        w = jnp.zeros((8, 128), jnp.float32)
        fn = pl.pallas_call(
            _probe_kernel,
            out_shape=jax.ShapeDtypeStruct((16, 128), jnp.float32),
            grid=(2,),
            in_specs=[
                pl.BlockSpec((8, 128), lambda i: (i, 0)),
                pl.BlockSpec((8, 128), lambda i: (0, 0),
                             pipeline_mode=pl.Buffered(1)),
            ],
            out_specs=pl.BlockSpec((8, 128), lambda i: (i, 0)),
        )
        jax.block_until_ready(fn(x, w))
        return True
    except Exception:
        return False


def _weight_spec(block_shape, single_buffer):
    """BlockSpec for a VMEM-resident weight (constant index_map)."""
    index_map = lambda i: (0,) * len(block_shape)
    if single_buffer:
        return pl.BlockSpec(block_shape, index_map,
                            pipeline_mode=pl.Buffered(1))
    return pl.BlockSpec(block_shape, index_map)


def _pick_tile(M, tm_max, footprint, budget):
    """Largest power-of-two row tile that fits the VMEM budget, then adjusted
    so the grid has >= 2 steps (v7x has 2 TensorCores)."""
    cands = [t for t in (1024, 512, 256, 128, 64, 32, 16, 8) if t <= tm_max]
    if not cands:
        cands = [8]
    tm_sel = cands[-1]
    for t in cands:
        if footprint(t) <= budget:
            tm_sel = t
            break
    if M <= 8:
        return M                    # single tiny full-extent block
    if M <= 2 * tm_sel:
        return min(_round_up(pl.cdiv(M, 2), 8), tm_sel)
    return tm_sel


# ----------------------------------------------------------------------------
# Forward
# ----------------------------------------------------------------------------
@functools.partial(
    jax.jit,
    static_argnames=("tm_max", "compute_dtype", "out_dtype",
                     "single_buffer_weights"))
def _ctc_head_forward_impl(x, params, *, tm_max, compute_dtype, out_dtype,
                           single_buffer_weights):
    B, T, K = x.shape
    M = T * B
    # Rows already in (T, B) order -> kernel writes the final (T, B, N) layout
    # directly; only the narrow K-wide input pays a relayout.
    x2d = jnp.transpose(x, (1, 0, 2)).reshape(M, K).astype(compute_dtype)

    xb = jnp.dtype(compute_dtype).itemsize
    ob = jnp.dtype(out_dtype).itemsize
    wbuf = 1 if single_buffer_weights else 2
    budget = _vmem_budget_bytes()

    if "w" in params:  # mid_channels is None -> single fc
        w, b = params["w"], params["b"]
        n_out = w.shape[1]
        w_c, b2d = _pad_out_cols(w.astype(compute_dtype), b.astype(jnp.float32))
        n_pad = w_c.shape[1]
        # Lane-dense store: for tiny charsets keep the padded 128-wide block and
        # slice in the wrapper instead of masked partial stores every step.
        n_store = n_pad if n_out < 128 else n_out

        def footprint(t):
            return int(2 * t * K * xb                 # x tiles (double-buffered)
                       + wbuf * K * n_pad * xb        # resident W
                       + 2 * 8 * n_pad * 4            # bias (tiny)
                       + 2 * t * n_store * ob         # out tiles (double-buffered)
                       + 3 * t * n_pad * 4            # logits/exp/epilogue temps
                       + (2 << 20))                   # slack

        tm_eff = _pick_tile(M, tm_max, footprint, budget)
        grid = (pl.cdiv(M, tm_eff),)
        vmem_limit = int(min(budget, max(footprint(tm_eff), 32 << 20)))

        out2d = pl.pallas_call(
            _ctc_head_kernel,
            out_shape=jax.ShapeDtypeStruct((M, n_store), out_dtype),
            grid_spec=pltpu.PrefetchScalarGridSpec(
                num_scalar_prefetch=0,
                grid=grid,
                in_specs=[
                    pl.BlockSpec((tm_eff, K), lambda i: (i, 0)),
                    _weight_spec((K, n_pad), single_buffer_weights),
                    pl.BlockSpec((1, n_pad), lambda i: (0, 0)),
                ],
                out_specs=pl.BlockSpec((tm_eff, n_store), lambda i: (i, 0)),
            ),
            compiler_params=pltpu.CompilerParams(
                dimension_semantics=("parallel",),
                vmem_limit_bytes=vmem_limit),
            cost_estimate=pl.CostEstimate(
                flops=2 * M * K * n_pad,
                transcendentals=M * n_pad,
                bytes_accessed=(M * K * xb + K * n_pad * xb + n_pad * 4
                                + M * n_store * ob)),
        )(x2d, w_c, b2d)

    else:  # mid_channels path: fc1 -> fc2
        w1, b1 = params["w1"], params["b1"]
        w2, b2 = params["w2"], params["b2"]
        n_out = w2.shape[1]
        w1_p, b1_p, w2_p = _pad_mid_dim(w1.astype(jnp.float32),
                                        b1.astype(jnp.float32),
                                        w2.astype(jnp.float32))
        n_mid_pad = w1_p.shape[1]
        w2_c, b2_2d = _pad_out_cols(w2_p.astype(compute_dtype),
                                    b2.astype(jnp.float32))
        w1_c = w1_p.astype(compute_dtype)
        n_pad = w2_c.shape[1]
        n_store = n_pad if n_out < 128 else n_out

        def footprint(t):
            return int(2 * t * K * xb
                       + wbuf * (K * n_mid_pad * xb + n_mid_pad * n_pad * xb)
                       + 2 * 8 * (n_mid_pad + n_pad) * 4
                       + 2 * t * n_store * ob
                       + t * n_mid_pad * (4 + xb)      # hidden h (f32 + bf16 cast)
                       + 3 * t * n_pad * 4
                       + (2 << 20))

        tm_eff = _pick_tile(M, tm_max, footprint, budget)
        grid = (pl.cdiv(M, tm_eff),)
        vmem_limit = int(min(budget, max(footprint(tm_eff), 32 << 20)))

        out2d = pl.pallas_call(
            _ctc_head_mid_kernel,
            out_shape=jax.ShapeDtypeStruct((M, n_store), out_dtype),
            grid_spec=pltpu.PrefetchScalarGridSpec(
                num_scalar_prefetch=0,
                grid=grid,
                in_specs=[
                    pl.BlockSpec((tm_eff, K), lambda i: (i, 0)),
                    _weight_spec((K, n_mid_pad), single_buffer_weights),
                    pl.BlockSpec((1, n_mid_pad), lambda i: (0, 0)),
                    _weight_spec((n_mid_pad, n_pad), single_buffer_weights),
                    pl.BlockSpec((1, n_pad), lambda i: (0, 0)),
                ],
                out_specs=pl.BlockSpec((tm_eff, n_store), lambda i: (i, 0)),
            ),
            compiler_params=pltpu.CompilerParams(
                dimension_semantics=("parallel",),
                vmem_limit_bytes=vmem_limit),
            cost_estimate=pl.CostEstimate(
                flops=2 * M * K * n_mid_pad + 2 * M * n_mid_pad * n_pad,
                transcendentals=M * n_pad,
                bytes_accessed=(M * K * xb + K * n_mid_pad * xb
                                + n_mid_pad * n_pad * xb
                                + (n_mid_pad + n_pad) * 4 + M * n_store * ob)),
        )(x2d, w1_c, b1_p, w2_c, b2_2d)

    # Rows already in (t, b) order -> final layout is a free reshape; only
    # tiny charsets (< 128) pay a cheap wrapper-side slice of the lane pad.
    out = out2d.reshape(T, B, n_store)
    if n_store != n_out:
        out = out[:, :, :n_out]
    return out


def ctc_head_forward(x, params, tm_max=512, compute_dtype=jnp.bfloat16,
                     out_dtype=jnp.float32):
    """x: (B, T, in_channels) f32.  Returns (T, B, out_channels) in `out_dtype`,
    matching `predicts.permute(1, 0, 2).log_softmax(2)` of the PyTorch module.

    compute_dtype=jnp.float32 is an accuracy escape hatch for very large
    in_channels; out_dtype=jnp.bfloat16 halves HBM write traffic on v5e."""
    return _ctc_head_forward_impl(
        x, params, tm_max=tm_max, compute_dtype=compute_dtype,
        out_dtype=out_dtype, single_buffer_weights=_single_buffer_supported())


def init_ctc_head_params(key, in_channels, out_channels, mid_channels=None):
    """Synthetic params mirroring nn.Linear shapes, stored as (in, out)."""
    if mid_channels is None:
        k1, k2 = jax.random.split(key, 2)
        return {
            "w": jax.random.normal(k1, (in_channels, out_channels),
                                   jnp.float32) * 0.05,
            "b": jax.random.normal(k2, (out_channels,), jnp.float32) * 0.05,
        }
    k1, k2, k3, k4 = jax.random.split(key, 4)
    return {
        "w1": jax.random.normal(k1, (in_channels, mid_channels),
                                jnp.float32) * 0.05,
        "b1": jax.random.normal(k2, (mid_channels,), jnp.float32) * 0.05,
        "w2": jax.random.normal(k3, (mid_channels, out_channels),
                                jnp.float32) * 0.05,
        "b2": jax.random.normal(k4, (out_channels,), jnp.float32) * 0.05,
    }


if __name__ == "__main__":
    key = jax.random.PRNGKey(0)
    kx, kp1, kp2, kp3 = jax.random.split(key, 4)

    B, T, in_channels = 2, 8, 32
    x = jax.random.normal(kx, (B, T, in_channels), jnp.float32)

    # --- single-fc path (out_channels multiple of 128 -> lane-dense output) ---
    out_channels = 256
    params = init_ctc_head_params(kp1, in_channels, out_channels,
                                  mid_channels=None)
    out = jax.block_until_ready(ctc_head_forward(x, params))
    logits = x @ params["w"] + params["b"]
    ref = jax.nn.log_softmax(jnp.transpose(logits, (1, 0, 2)), axis=2)
    assert out.shape == (T, B, out_channels)
    assert jnp.max(jnp.abs(out - ref)) < 3e-2  # bf16 matmul vs f32 reference

    # --- mid_channels path (n_mid padded to 128, out NOT multiple of 128) ---
    mid_channels, out_channels2 = 64, 160
    params2 = init_ctc_head_params(kp2, in_channels, out_channels2,
                                   mid_channels=mid_channels)
    out2 = jax.block_until_ready(ctc_head_forward(x, params2))
    h = x @ params2["w1"] + params2["b1"]
    logits2 = h @ params2["w2"] + params2["b2"]
    ref2 = jax.nn.log_softmax(jnp.transpose(logits2, (1, 0, 2)), axis=2)
    assert out2.shape == (T, B, out_channels2)
    assert jnp.max(jnp.abs(out2 - ref2)) < 3e-2

    # --- tiny-charset path (out_channels < 128 -> padded store + wrapper slice)
    out_channels3 = 80
    params3 = init_ctc_head_params(kp3, in_channels, out_channels3,
                                   mid_channels=None)
    out3 = jax.block_until_ready(ctc_head_forward(x, params3))
    logits3 = x @ params3["w"] + params3["b"]
    ref3 = jax.nn.log_softmax(jnp.transpose(logits3, (1, 0, 2)), axis=2)
    assert out3.shape == (T, B, out_channels3)
    assert jnp.max(jnp.abs(out3 - ref3)) < 3e-2

    print("KERNEL_OK")
</pallas_src>

<mosaic_0001>
module attributes {stable_mosaic.version = 11 : i64} {
  func.func @_probe_kernel(%arg0: i32, %arg1: memref<8x128xf32, #tpu.memory_space<vmem>>, %arg2: memref<8x128xf32, #tpu.memory_space<vmem>>, %arg3: memref<8x128xf32, #tpu.memory_space<vmem>>) attributes {dimension_semantics = [#tpu.dimension_semantics<arbitrary>], iteration_bounds = array<i64: 2>, scalar_prefetch = 0 : i64, scratch_operands = 0 : i64, tpu.core_type = #tpu.core_type<tc>, window_params = [{transform_indices = @transform_0, window_bounds = array<i64: 8, 128>}, {pipeline_mode = #tpu.pipeline_mode<synchronous>, transform_indices = @transform_1, window_bounds = array<i64: 8, 128>}, {transform_indices = @transform_2, window_bounds = array<i64: 8, 128>}]} {
    %c0 = arith.constant 0 : index
    %c0_0 = arith.constant 0 : index
    %0 = vector.load %arg1[%c0, %c0_0] : memref<8x128xf32, #tpu.memory_space<vmem>>, vector<8x128xf32>
    %c0_1 = arith.constant 0 : index
    %c0_2 = arith.constant 0 : index
    %1 = vector.load %arg2[%c0_1, %c0_2] : memref<8x128xf32, #tpu.memory_space<vmem>>, vector<8x128xf32>
    %2 = arith.addf %0, %1 : vector<8x128xf32>
    %c0_3 = arith.constant 0 : index
    %c0_4 = arith.constant 0 : index
    %3 = vector.load %arg3[%c0_3, %c0_4] : memref<8x128xf32, #tpu.memory_space<vmem>>, vector<8x128xf32>
    tpu.vector_store %arg3[%c0_3, %c0_4], %2 {strides = array<i32>} : memref<8x128xf32, #tpu.memory_space<vmem>>, vector<8x128xf32>,
    return
  }
  func.func @transform_0(%arg0: i32) -> (i32, i32) {
    %c0_i32 = arith.constant 0 : i32
    %c0_i32_0 = arith.constant 0 : i32
    return %arg0, %c0_i32 : i32, i32
  }
  func.func @transform_1(%arg0: i32) -> (i32, i32) {
    %c0_i32 = arith.constant 0 : i32
    %c0_i32_0 = arith.constant 0 : i32
    %c0_i32_1 = arith.constant 0 : i32
    return %c0_i32, %c0_i32_0 : i32, i32
  }
  func.func @transform_2(%arg0: i32) -> (i32, i32) {
    %c0_i32 = arith.constant 0 : i32
    %c0_i32_0 = arith.constant 0 : i32
    return %arg0, %c0_i32 : i32, i32
  }
}

module attributes {stable_mosaic.version = 11 : i64} {
  func.func @_ctc_head_kernel(%arg0: i32, %arg1: memref<8x32xbf16, #tpu.memory_space<vmem>>, %arg2: memref<32x256xbf16, #tpu.memory_space<vmem>>, %arg3: memref<1x256xf32, #tpu.memory_space<vmem>>, %arg4: memref<8x256xf32, #tpu.memory_space<vmem>>) attributes {dimension_semantics = [#tpu.dimension_semantics<parallel>], iteration_bounds = array<i64: 2>, scalar_prefetch = 0 : i64, scratch_operands = 0 : i64, tpu.core_type = #tpu.core_type<tc>, window_params = [{transform_indices = @transform_0, window_bounds = array<i64: 8, 32>}, {pipeline_mode = #tpu.pipeline_mode<synchronous>, transform_indices = @transform_1, window_bounds = array<i64: 32, 256>}, {pipeline_mode = #tpu.pipeline_mode<synchronous>, transform_indices = @transform_2, window_bounds = array<i64: 1, 256>}, {transform_indices = @transform_3, window_bounds = array<i64: 8, 256>}]} {
    %c0 = arith.constant 0 : index
    %c0_0 = arith.constant 0 : index
    %0 = vector.load %arg1[%c0, %c0_0] : memref<8x32xbf16, #tpu.memory_space<vmem>>, vector<8x32xbf16>
    %c0_1 = arith.constant 0 : index
    %c0_2 = arith.constant 0 : index
    %1 = vector.load %arg2[%c0_1, %c0_2] : memref<32x256xbf16, #tpu.memory_space<vmem>>, vector<32x256xbf16>
    %cst = arith.constant dense<0.000000e+00> : vector<8x256xf32>
    %2 = tpu.matmul %0, %1, %cst {dimension_numbers = #tpu.dot_dimension_numbers<[1], [0], [0], [1], [0, 0, 1, 1], [], []>} : vector<8x32xbf16>, vector<32x256xbf16>, vector<8x256xf32> -> vector<8x256xf32>
    %c0_3 = arith.constant 0 : index
    %c0_4 = arith.constant 0 : index
    %3 = vector.load %arg3[%c0_3, %c0_4] : memref<1x256xf32, #tpu.memory_space<vmem>>, vector<1x256xf32>
    %4 = vector.broadcast %3 : vector<1x256xf32> to vector<8x256xf32>
    %5 = arith.addf %2, %4 : vector<8x256xf32>
    %cst_5 = arith.constant dense<0xFF800000> : vector<8xf32>
    %6 = vector.multi_reduction <maximumf>, %5, %cst_5 [1] : vector<8x256xf32> to vector<8xf32>
    %7 = vector.shape_cast %6 : vector<8xf32> to vector<8x1xf32>
    %8 = vector.broadcast %7 : vector<8x1xf32> to vector<8x256xf32>
    %9 = arith.subf %5, %8 : vector<8x256xf32>
    %10 = math.exp %9 : vector<8x256xf32>
    %cst_6 = arith.constant dense<0.000000e+00> : vector<8xf32>
    %11 = vector.multi_reduction <add>, %10, %cst_6 [1] : vector<8x256xf32> to vector<8xf32>
    %12 = vector.shape_cast %11 : vector<8xf32> to vector<8x1xf32>
    %13 = math.log %12 : vector<8x1xf32>
    %14 = arith.addf %7, %13 : vector<8x1xf32>
    %15 = vector.broadcast %14 : vector<8x1xf32> to vector<8x256xf32>
    %16 = arith.subf %5, %15 : vector<8x256xf32>
    %c0_7 = arith.constant 0 : index
    %c0_8 = arith.constant 0 : index
    %17 = vector.load %arg4[%c0_7, %c0_8] : memref<8x256xf32, #tpu.memory_space<vmem>>, vector<8x256xf32>
    tpu.vector_store %arg4[%c0_7, %c0_8], %16 {strides = array<i32>} : memref<8x256xf32, #tpu.memory_space<vmem>>, vector<8x256xf32>,
    return
  }
  func.func @transform_0(%arg0: i32) -> (i32, i32) {
    %c0_i32 = arith.constant 0 : i32
    %c0_i32_0 = arith.constant 0 : i32
    return %arg0, %c0_i32 : i32, i32
  }
  func.func @transform_1(%arg0: i32) -> (i32, i32) {
    %c0_i32 = arith.constant 0 : i32
    %c0_i32_0 = arith.constant 0 : i32
    %c0_i32_1 = arith.constant 0 : i32
    return %c0_i32, %c0_i32_0 : i32, i32
  }
  func.func @transform_2(%arg0: i32) -> (i32, i32) {
    %c0_i32 = arith.constant 0 : i32
    %c0_i32_0 = arith.constant 0 : i32
    %c0_i32_1 = arith.constant 0 : i32
    return %c0_i32, %c0_i32_0 : i32, i32
  }
  func.func @transform_3(%arg0: i32) -> (i32, i32) {
    %c0_i32 = arith.constant 0 : i32
    %c0_i32_0 = arith.constant 0 : i32
    return %arg0, %c0_i32 : i32, i32
  }
}

</mosaic_0001>

<llo_original>
// kernel: tpu_custom_call.1
$region0: #{tpu_custom_call.1}
  #allocation0 [shape = 'u32[]', space=smem, size = 0x4, offset = 0x4, fixed_abs, tag = 'smem constant byte address 0x4 - core index']
  #allocation1 [shape = 'u32[144,128]{1,0:T(1,128)}', space=vmem, size = 0x12000, scoped, tag = 'internal scratch']
  %s0 = inlined_call_operand.hbm [shape: f32[16,128], index: 0, kind: input, shape index: {}]
  %s1 = inlined_call_operand.hbm [shape: f32[8,128], index: 1, kind: input, shape index: {}]
  %s2 = inlined_call_operand.hbm [shape: f32[16,128], index: 2, kind: output, shape index: {}]
  %s3 = sld [smem:[#allocation0]]
  $region49: #{tpu_custom_call.1} parent=0
    _
  %s5 = ssub.s32 1, %s3
  %s6 = scalar_select 0, %s5, %s3
  $region1: #{tpu_custom_call.1} parent=0
    #allocation2 [shape = 'u8[8192]{0}', space=vmem, size = 0x2000, scoped, tag = 'input window, operand 0']
    #allocation3 [shape = 's32[2]{0}', space=sflag, size = 0x8, scoped, tag = 'scoped memory for tpu_custom_call.1']
    #allocation4 [shape = 's32[2]{0}', space=sflag, size = 0x8, scoped, tag = 'scoped memory for tpu_custom_call.1']
    #allocation5 [shape = 'u8[4096]{0}', space=vmem, size = 0x1000, scoped, tag = 'input window, operand 1, single buffered']
    #allocation6 [shape = 's32[1]{0}', space=sflag, size = 0x4, scoped, tag = 'scoped memory for tpu_custom_call.1']
    #allocation7 [shape = 'u8[8192]{0}', space=vmem, size = 0x2000, scoped, tag = 'output window, operand 0']
    %7 = vsyncpa [#allocation3], 0
    %s8 = scalar_lea.sflag [#allocation3], 1
    %9 = vsyncpa %s8, 0
    %10 = vsyncpa [#allocation6], 0
    %11 = vsyncpa [#allocation4], 0
    %s12 = scalar_lea.sflag [#allocation4], 1
    %13 = vsyncpa %s12, 0
    loop: start=0, step=1, limit=4
    $region2: #{tpu_custom_call.1} parent=1 // loop_pre_header
      _
    $region3: #{tpu_custom_call.1} parent=1 // loop_header
      %s15 = sphi 0, %s19
      %p16 = scmp.ge.s32.totalorder %s15, 4
      %s25 = sphi 0, %s27
      %s28 = sphi 0, %s25
      %s29 = sphi 0, %s28
      %s45 = sphi 0, %s29
      %s49 = sphi 0, %s49
      %s51 = sphi 0, %s49
      %s52 = sphi 0, %s51
      %s66 = sphi 0, %s52
      %s72 = sphi 0, %s74
      %s75 = sphi 0, %s72
      %s76 = sphi 0, %s75
      %s92 = sphi 0, %s76
    $region4: #{tpu_custom_call.1} parent=1 // loop_header_branch
      %18 = sbr.rel (%p16) target = $region8
    $region5: #{tpu_custom_call.1} parent=1 // loop_body
      %s20 = ssub.s32 %s15, 1
      %s21 = ssub.s32 %s15, 2
      %s22 = sadd.s32 %s15, 1
      %s23 = ssub.s32 %s15, %s22
      %p24 = scmp.eq.s32.totalorder %s23, 0
      %s26 = sadd.s32 %s25, 1
      %s27 = scalar_select %p24, %s25, %s26
      %p30 = pneg %p24
      %p31 = scmp.eq.s32.totalorder %s15, 1
      %p32 = por %p30, %p31
      %p33 = scmp.ne.s32.totalorder %s25, %s28
      %p34 = scmp.eq.s32.totalorder %s15, 0
      %p35 = por %p33, %p34
      %p36 = scmp.ne.s32.totalorder %s25, %s28
      %p37 = scmp.eq.s32.totalorder %s20, 1
      %p38 = por %p36, %p37
      %p39 = scmp.ne.s32.totalorder %s28, %s29
      %p40 = scmp.eq.s32.totalorder %s20, 0
      %p41 = por %p39, %p40
      %p42 = scmp.ne.s32.totalorder %s28, %s29
      %p43 = scmp.eq.s32.totalorder %s21, 1
      %p44 = por %p42, %p43
      %p46 = scmp.ne.s32.totalorder %s29, %s45
      %p47 = scmp.eq.s32.totalorder %s21, 0
      %p48 = por %p46, %p47
      %s50 = sadd.s32 %s49, 1
      %p53 = scmp.eq.s32.totalorder %s15, 1
      %p54 = scmp.ne.s32.totalorder %s49, %s51
      %p55 = scmp.eq.s32.totalorder %s15, 0
      %p56 = por %p54, %p55
      %p57 = scmp.ne.s32.totalorder %s49, %s51
      %p58 = scmp.eq.s32.totalorder %s20, 1
      %p59 = por %p57, %p58
      %p60 = scmp.ne.s32.totalorder %s51, %s52
      %p61 = scmp.eq.s32.totalorder %s20, 0
      %p62 = por %p60, %p61
      %p63 = scmp.ne.s32.totalorder %s51, %s52
      %p64 = scmp.eq.s32.totalorder %s21, 1
      %p65 = por %p63, %p64
      %p67 = scmp.ne.s32.totalorder %s52, %s66
      %p68 = scmp.eq.s32.totalorder %s21, 0
      %p69 = por %p67, %p68
      %s70 = ssub.s32 %s15, %s22
      %p71 = scmp.eq.s32.totalorder %s70, 0
      %s73 = sadd.s32 %s72, 1
      %s74 = scalar_select %p71, %s72, %s73
      %p77 = pneg %p71
      %p78 = scmp.eq.s32.totalorder %s15, 1
      %p79 = por %p77, %p78
      %p80 = scmp.ne.s32.totalorder %s72, %s75
      %p81 = scmp.eq.s32.totalorder %s15, 0
      %p82 = por %p80, %p81
      %p83 = scmp.ne.s32.totalorder %s72, %s75
      %p84 = scmp.eq.s32.totalorder %s20, 1
      %p85 = por %p83, %p84
      %p86 = scmp.ne.s32.totalorder %s75, %s76
      %p87 = scmp.eq.s32.totalorder %s20, 0
      %p88 = por %p86, %p87
      %p89 = scmp.ne.s32.totalorder %s75, %s76
      %p90 = scmp.eq.s32.totalorder %s21, 1
      %p91 = por %p89, %p90
      %p93 = scmp.ne.s32.totalorder %s76, %s92
      %p94 = scmp.eq.s32.totalorder %s21, 0
      %p95 = por %p93, %p94
      %p96 = scmp.le.s32.totalorder 1, %s15
      %p97 = scmp.lt.s32.totalorder %s15, 3
      %p98 = pnand %p96, %p97
      %p99 = pneg %p98
      // Predicated region
      $region9: #{tpu_custom_call.1} parent=5 // pred_check
        _
      $region10: #{tpu_custom_call.1} parent=5 // pred_check_branch
        %101 = sbr.rel (%p98) target = $region12
      $region11: #{tpu_custom_call.1} parent=5 // pred_region
        %s102 = ssub.s32 %s15, 1
        // Predicated region
        $region13: #{tpu_custom_call.1} parent=11 // pred_check
          %p103 = pneg %p62
        $region14: #{tpu_custom_call.1} parent=11 // pred_check_branch
          %105 = sbr.rel (%p103) target = $region16
        $region15: #{tpu_custom_call.1} parent=11 // pred_region
          %s107 = ssub.s32 128, 128
          %108 = vsyncadd [#allocation6], %s107
          %s110 = sshll.u32 [#allocation5], 4
          %s111 = int_to_ptr.vmem [resolvable:$true] %s110
          %113 = dma.hbm_to_vmem [thread:$0]  %s1, 128, %s111, [#allocation6]
        $region16: #{tpu_custom_call.1} parent=11 // pred_fallthru
          _
      $region12: #{tpu_custom_call.1} parent=5 // pred_fallthru
        _
      %p114 = scmp.lt.s32.totalorder %s15, 2
      // Predicated region
      $region17: #{tpu_custom_call.1} parent=5 // pred_check
        %p115 = pneg %p114
      $region18: #{tpu_custom_call.1} parent=5 // pred_check_branch
        %117 = sbr.rel (%p115) target = $region20
      $region19: #{tpu_custom_call.1} parent=5 // pred_region
        // Predicated region
        $region21: #{tpu_custom_call.1} parent=19 // pred_check
          %p118 = pneg %p35
        $region22: #{tpu_custom_call.1} parent=19 // pred_check_branch
          %120 = sbr.rel (%p118) target = $region24
        $region23: #{tpu_custom_call.1} parent=19 // pred_region
          %s121 = sand.u32 %s25, 1
          %s122 = scalar_lea.sflag [#allocation3], %s121
          %s123 = sand.u32 %s25, 1
          %s124 = smul.addr %s123, 8
          %s125 = scalar_lea.vmem [#allocation2], %s124
          %s127 = ssub.s32 128, 128
          %128 = vsyncadd %s122, %s127
          %s129 = smul.addr %s15, 128
          %s130 = scalar_lea.hbm %s0, %s129
          %s132 = sshll.u32 %s125, 4
          %s133 = int_to_ptr.vmem [resolvable:$true] %s132
          %135 = dma.hbm_to_vmem [thread:$0]  %s130, 128, %s133, %s122
        $region24: #{tpu_custom_call.1} parent=19 // pred_fallthru
          _
      $region20: #{tpu_custom_call.1} parent=5 // pred_fallthru
        _
      %p136 = scmp.le.s32.totalorder 1, %s15
      %p137 = scmp.lt.s32.totalorder %s15, 3
      %p138 = pnand %p136, %p137
      %p139 = pneg %p138
      // Predicated region
      $region25: #{tpu_custom_call.1} parent=5 // pred_check
        _
      $region26: #{tpu_custom_call.1} parent=5 // pred_check_branch
        %141 = sbr.rel (%p138) target = $region28
      $region27: #{tpu_custom_call.1} parent=5 // pred_region
        %s142 = ssub.s32 %s15, 1
        %s143 = sand.u32 %s28, 1
        %s144 = scalar_lea.sflag [#allocation3], %s143
        %s145 = sand.u32 %s28, 1
        %s146 = smul.addr %s145, 8
        %s147 = scalar_lea.vmem [#allocation2], %s146
        // Predicated region
        $region29: #{tpu_custom_call.1} parent=27 // pred_check
          %p148 = pneg %p41
        $region30: #{tpu_custom_call.1} parent=27 // pred_check_branch
          %150 = sbr.rel (%p148) target = $region32
        $region31: #{tpu_custom_call.1} parent=27 // pred_region
          %151 = dma.done %s144, 128
        $region32: #{tpu_custom_call.1} parent=27 // pred_fallthru
          _
        // Predicated region
        $region33: #{tpu_custom_call.1} parent=27 // pred_check
          %p152 = pneg %p62
        $region34: #{tpu_custom_call.1} parent=27 // pred_check_branch
          %154 = sbr.rel (%p152) target = $region36
        $region35: #{tpu_custom_call.1} parent=27 // pred_region
          %155 = dma.done [#allocation6], 128
        $region36: #{tpu_custom_call.1} parent=27 // pred_fallthru
          _
        %s156 = sand.u32 %s28, 1
        %s157 = scalar_lea.sflag [#allocation3], %s156
        %s158 = sand.u32 %s28, 1
        %s159 = smul.addr %s158, 8
        %s160 = scalar_lea.vmem [#allocation2], %s159
        %p161 = pneg %p41
        %p162 = pneg %p38
        %p163 = pneg %p62
        %p164 = pneg %p59
        %p165 = pneg %p88
        %p166 = pneg %p85
        %s167 = sand.u32 %s75, 1
        %s168 = scalar_lea.sflag [#allocation4], %s167
        %s169 = sand.u32 %s75, 1
        %s170 = smul.addr %s169, 8
        %s171 = scalar_lea.vmem [#allocation7], %s170
        %v172 = vld [vmem:[%s147] sm:$0xff]
        %v173 = vld [vmem:[#allocation5] sm:$0xff]
        %v174 = vadd.f32 %v172, %v173
        %175 = vst [vmem:[%s171] sm:$0xff] %v174
        %s176 = sand.u32 %s75, 1
        %s177 = scalar_lea.sflag [#allocation4], %s176
        %s178 = sand.u32 %s75, 1
        %s179 = smul.addr %s178, 8
        %s180 = scalar_lea.vmem [#allocation7], %s179
        // Predicated region
        $region37: #{tpu_custom_call.1} parent=27 // pred_check
          %p181 = pneg %p85
        $region38: #{tpu_custom_call.1} parent=27 // pred_check_branch
          %183 = sbr.rel (%p181) target = $region40
        $region39: #{tpu_custom_call.1} parent=27 // pred_region
          %s185 = ssub.s32 128, 128
          %186 = vsyncadd %s177, %s185
          %s187 = smul.addr %s20, 128
          %s188 = scalar_lea.hbm %s2, %s187
          %s190 = sshll.u32 %s180, 4
          %s191 = int_to_ptr.vmem [resolvable:$true] %s190
          %193 = dma.vmem_to_hbm [thread:$0]  %s191, 128, %s188, %s177
        $region40: #{tpu_custom_call.1} parent=27 // pred_fallthru
          _
      $region28: #{tpu_custom_call.1} parent=5 // pred_fallthru
        _
      %p194 = scmp.le.s32.totalorder 2, %s15
      // Predicated region
      $region41: #{tpu_custom_call.1} parent=5 // pred_check
        %p195 = pneg %p194
      $region42: #{tpu_custom_call.1} parent=5 // pred_check_branch
        %197 = sbr.rel (%p195) target = $region44
      $region43: #{tpu_custom_call.1} parent=5 // pred_region
        %s198 = ssub.s32 %s15, 2
        // Predicated region
        $region45: #{tpu_custom_call.1} parent=43 // pred_check
          %p199 = pneg %p91
        $region46: #{tpu_custom_call.1} parent=43 // pred_check_branch
          %201 = sbr.rel (%p199) target = $region48
        $region47: #{tpu_custom_call.1} parent=43 // pred_region
          %s202 = sand.u32 %s76, 1
          %s203 = scalar_lea.sflag [#allocation4], %s202
          %s204 = sand.u32 %s76, 1
          %s205 = smul.addr %s204, 8
          %s206 = scalar_lea.vmem [#allocation7], %s205
          %207 = dma.done %s203, 128
        $region48: #{tpu_custom_call.1} parent=43 // pred_fallthru
          _
      $region44: #{tpu_custom_call.1} parent=5 // pred_fallthru
        _
    $region6: #{tpu_custom_call.1} parent=1 // loop_footer
      %s19 = sadd.s32 1, %s15
    $region7: #{tpu_custom_call.1} parent=1 // loop_footer_branch
      %14 = sbr.rel target = $region3
    $region8: #{tpu_custom_call.1} parent=1 // loop_exit
      _
    %208 = vsyncpa [#allocation3], 1
    %s209 = scalar_lea.sflag [#allocation3], 1
    %210 = vsyncpa %s209, 1
    %211 = vsyncpa [#allocation6], 1
    %212 = vsyncpa [#allocation4], 1
    %s213 = scalar_lea.sflag [#allocation4], 1
    %214 = vsyncpa %s213, 1

// kernel: _ctc_head_forward_impl.1
$region0: #{_ctc_head_forward_impl.1}
  #allocation0 [shape = 'u32[]', space=smem, size = 0x4, offset = 0x4, fixed_abs, tag = 'smem constant byte address 0x4 - core index']
  #allocation1 [shape = 'u32[144,128]{1,0:T(1,128)}', space=vmem, size = 0x12000, scoped, tag = 'internal scratch']
  %s0 = inlined_call_operand.vmem [shape: bf16[16,32], index: 0, kind: input, shape index: {}]
  %s1 = inlined_call_operand.vmem [shape: bf16[32,256], index: 1, kind: input, shape index: {}]
  %s2 = inlined_call_operand.vmem [shape: f32[1,256], index: 2, kind: input, shape index: {}]
  %s3 = inlined_call_operand.vmem [shape: f32[16,256], index: 3, kind: output, shape index: {}]
  %s4 = sld [smem:[#allocation0]]
  $region45: #{_ctc_head_forward_impl.1} parent=0
    _
  %s6 = ssub.s32 1, %s4
  %s7 = scalar_select 0, %s6, %s4
  loop: start=0, step=1, limit=4
  $region2: #{_ctc_head_forward_impl.1} parent=0 // loop_pre_header
    _
  $region3: #{_ctc_head_forward_impl.1} parent=0 // loop_header
    %s9 = sphi 0, %s13
    %p10 = scmp.ge.s32.totalorder %s9, 4
    %s19 = sphi 0, %s21
    %s22 = sphi 0, %s19
    %s23 = sphi 0, %s22
    %s39 = sphi 0, %s23
    %s43 = sphi 0, %s43
    %s45 = sphi 0, %s43
    %s46 = sphi 0, %s45
    %s60 = sphi 0, %s46
    %s64 = sphi 0, %s64
    %s66 = sphi 0, %s64
    %s67 = sphi 0, %s66
    %s81 = sphi 0, %s67
    %s87 = sphi 0, %s89
    %s90 = sphi 0, %s87
    %s91 = sphi 0, %s90
    %s107 = sphi 0, %s91
  $region4: #{_ctc_head_forward_impl.1} parent=0 // loop_header_branch
    %12 = sbr.rel (%p10) target = $region8
  $region5: #{_ctc_head_forward_impl.1} parent=0 // loop_body
    %s14 = ssub.s32 %s9, 1
    %s15 = ssub.s32 %s9, 2
    %s16 = sadd.s32 %s9, 1
    %s17 = ssub.s32 %s9, %s16
    %p18 = scmp.eq.s32.totalorder %s17, 0
    %s20 = sadd.s32 %s19, 1
    %s21 = scalar_select %p18, %s19, %s20
    %p24 = pneg %p18
    %p25 = scmp.eq.s32.totalorder %s9, 1
    %p26 = por %p24, %p25
    %p27 = scmp.ne.s32.totalorder %s19, %s22
    %p28 = scmp.eq.s32.totalorder %s9, 0
    %p29 = por %p27, %p28
    %p30 = scmp.ne.s32.totalorder %s19, %s22
    %p31 = scmp.eq.s32.totalorder %s14, 1
    %p32 = por %p30, %p31
    %p33 = scmp.ne.s32.totalorder %s22, %s23
    %p34 = scmp.eq.s32.totalorder %s14, 0
    %p35 = por %p33, %p34
    %p36 = scmp.ne.s32.totalorder %s22, %s23
    %p37 = scmp.eq.s32.totalorder %s15, 1
    %p38 = por %p36, %p37
    %p40 = scmp.ne.s32.totalorder %s23, %s39
    %p41 = scmp.eq.s32.totalorder %s15, 0
    %p42 = por %p40, %p41
    %s44 = sadd.s32 %s43, 1
    %p47 = scmp.eq.s32.totalorder %s9, 1
    %p48 = scmp.ne.s32.totalorder %s43, %s45
    %p49 = scmp.eq.s32.totalorder %s9, 0
    %p50 = por %p48, %p49
    %p51 = scmp.ne.s32.totalorder %s43, %s45
    %p52 = scmp.eq.s32.totalorder %s14, 1
    %p53 = por %p51, %p52
    %p54 = scmp.ne.s32.totalorder %s45, %s46
    %p55 = scmp.eq.s32.totalorder %s14, 0
    %p56 = por %p54, %p55
    %p57 = scmp.ne.s32.totalorder %s45, %s46
    %p58 = scmp.eq.s32.totalorder %s15, 1
    %p59 = por %p57, %p58
    %p61 = scmp.ne.s32.totalorder %s46, %s60
    %p62 = scmp.eq.s32.totalorder %s15, 0
    %p63 = por %p61, %p62
    %s65 = sadd.s32 %s64, 1
    %p68 = scmp.eq.s32.totalorder %s9, 1
    %p69 = scmp.ne.s32.totalorder %s64, %s66
    %p70 = scmp.eq.s32.totalorder %s9, 0
    %p71 = por %p69, %p70
    %p72 = scmp.ne.s32.totalorder %s64, %s66
    %p73 = scmp.eq.s32.totalorder %s14, 1
    %p74 = por %p72, %p73
    %p75 = scmp.ne.s32.totalorder %s66, %s67
    %p76 = scmp.eq.s32.totalorder %s14, 0
    %p77 = por %p75, %p76
    %p78 = scmp.ne.s32.totalorder %s66, %s67
    %p79 = scmp.eq.s32.totalorder %s15, 1
    %p80 = por %p78, %p79
    %p82 = scmp.ne.s32.totalorder %s67, %s81
    %p83 = scmp.eq.s32.totalorder %s15, 0
    %p84 = por %p82, %p83
    %s85 = ssub.s32 %s9, %s16
    %p86 = scmp.eq.s32.totalorder %s85, 0
    %s88 = sadd.s32 %s87, 1
    %s89 = scalar_select %p86, %s87, %s88
    %p92 = pneg %p86
    %p93 = scmp.eq.s32.totalorder %s9, 1
    %p94 = por %p92, %p93
    %p95 = scmp.ne.s32.totalorder %s87, %s90
    %p96 = scmp.eq.s32.totalorder %s9, 0
    %p97 = por %p95, %p96
    %p98 = scmp.ne.s32.totalorder %s87, %s90
    %p99 = scmp.eq.s32.totalorder %s14, 1
    %p100 = por %p98, %p99
    %p101 = scmp.ne.s32.totalorder %s90, %s91
    %p102 = scmp.eq.s32.totalorder %s14, 0
    %p103 = por %p101, %p102
    %p104 = scmp.ne.s32.totalorder %s90, %s91
    %p105 = scmp.eq.s32.totalorder %s15, 1
    %p106 = por %p104, %p105
    %p108 = scmp.ne.s32.totalorder %s91, %s107
    %p109 = scmp.eq.s32.totalorder %s15, 0
    %p110 = por %p108, %p109
    %p111 = scmp.le.s32.totalorder 1, %s9
    %p112 = scmp.lt.s32.totalorder %s9, 3
    %p113 = pnand %p111, %p112
    %p114 = pneg %p113
    // Predicated region
    $region9: #{_ctc_head_forward_impl.1} parent=5 // pred_check
      _
    $region10: #{_ctc_head_forward_impl.1} parent=5 // pred_check_branch
      %116 = sbr.rel (%p113) target = $region12
    $region11: #{_ctc_head_forward_impl.1} parent=5 // pred_region
      %s117 = ssub.s32 %s9, 1
      // Predicated region
      $region13: #{_ctc_head_forward_impl.1} parent=11 // pred_check
        %p118 = pneg %p56
      $region14: #{_ctc_head_forward_impl.1} parent=11 // pred_check_branch
        %120 = sbr.rel (%p118) target = $region16
      $region15: #{_ctc_head_forward_impl.1} parent=11 // pred_region
        _
      $region16: #{_ctc_head_forward_impl.1} parent=11 // pred_fallthru
        _
      // Predicated region
      $region17: #{_ctc_head_forward_impl.1} parent=11 // pred_check
        %p121 = pneg %p77
      $region18: #{_ctc_head_forward_impl.1} parent=11 // pred_check_branch
        %123 = sbr.rel (%p121) target = $region20
      $region19: #{_ctc_head_forward_impl.1} parent=11 // pred_region
        _
      $region20: #{_ctc_head_forward_impl.1} parent=11 // pred_fallthru
        _
    $region12: #{_ctc_head_forward_impl.1} parent=5 // pred_fallthru
      _
    %p124 = scmp.lt.s32.totalorder %s9, 2
    // Predicated region
    $region21: #{_ctc_head_forward_impl.1} parent=5 // pred_check
      %p125 = pneg %p124
    $region22: #{_ctc_head_forward_impl.1} parent=5 // pred_check_branch
      %127 = sbr.rel (%p125) target = $region24
    $region23: #{_ctc_head_forward_impl.1} parent=5 // pred_region
      // Predicated region
      $region25: #{_ctc_head_forward_impl.1} parent=23 // pred_check
        %p128 = pneg %p29
      $region26: #{_ctc_head_forward_impl.1} parent=23 // pred_check_branch
        %130 = sbr.rel (%p128) target = $region28
      $region27: #{_ctc_head_forward_impl.1} parent=23 // pred_region
        %p131 = scmp.lt.s32.totalorder %s9, 1
        %s132 = scalar_select %p131, %s9, 1
        %s133 = smul.addr %s132, 4
        %s134 = scalar_lea.vmem %s0, %s133
      $region28: #{_ctc_head_forward_impl.1} parent=23 // pred_fallthru
        _
    $region24: #{_ctc_head_forward_impl.1} parent=5 // pred_fallthru
      _
    %p135 = scmp.le.s32.totalorder 1, %s9
    %p136 = scmp.lt.s32.totalorder %s9, 3
    %p137 = pnand %p135, %p136
    %p138 = pneg %p137
    // Predicated region
    $region29: #{_ctc_head_forward_impl.1} parent=5 // pred_check
      _
    $region30: #{_ctc_head_forward_impl.1} parent=5 // pred_check_branch
      %140 = sbr.rel (%p137) target = $region32
    $region31: #{_ctc_head_forward_impl.1} parent=5 // pred_region
      %s141 = ssub.s32 %s9, 1
      %p142 = scmp.lt.s32.totalorder %s14, 1
      %s143 = scalar_select %p142, %s14, 1
      %s144 = smul.addr %s143, 4
      %s145 = scalar_lea.vmem %s0, %s144
      %p146 = pneg %p35
      %p147 = pneg %p32
      %p148 = pneg %p56
      %p149 = pneg %p53
      %p150 = pneg %p77
      %p151 = pneg %p74
      %p152 = pneg %p103
      %p153 = pneg %p100
      %p154 = scmp.lt.s32.totalorder %s14, 1
      %s155 = scalar_select %p154, %s14, 1
      %s156 = smul.addr %s155, 2
      %s157 = smul.addr %s156, 8
      %s158 = scalar_lea.vmem %s3, %s157
      %p159 = scmp.lt.s32.totalorder %s14, 1
      %s160 = scalar_select %p159, %s14, 1
      %s161 = smul.addr %s160, 4
      %s162 = scalar_lea.vmem %s0, %s161
      %p163 = scmp.lt.s32.totalorder %s14, 1
      %s164 = scalar_select %p163, %s14, 1
      %s165 = smul.addr %s164, 2
      %s166 = smul.addr %s165, 8
      %s167 = scalar_lea.vmem %s3, %s166
      %v169 = vld [vmem:[%s162] sm:$0xf]
      %v170 = vld [vmem:[%s1] sm:$0xff]
      %v171 = vld [vmem:[%s1 + $0x8] sm:$0xff]
      %v172 = vld [vmem:[%s1 + $0x10] sm:$0xff]
      %v173 = vld [vmem:[%s1 + $0x18] sm:$0xff]
      %v174 = vld [vmem:[%s2] sm:$0x3]
      %v176 = vlaneseq
      %v177 = vshrl.u32 %v176, 7
      %v178 = vsub.s32 0, %v177
      %v179 = vrot.slane %v174, %v178
      %v180 = vlaneseq
      %v181 = vshrl.u32 %v180, 7
      %v182 = vsub.s32 1, %v181
      %v183 = vrot.slane %v174, %v182
      %v190 = vunpack.c.l.b16 %v170
      %v191 = vunpack.c.h.b16 %v170
      %v192 = vunpack.c.l.b16 %v171
      %v193 = vunpack.c.h.b16 %v171
      %v194 = vunpack.c.l.b16 %v172
      %v195 = vunpack.c.h.b16 %v172
      %v196 = vunpack.c.l.b16 %v173
      %v197 = vunpack.c.h.b16 %v173
      %v198 = vpack.c.b16 %v192, %v190
      %v199 = vpack.c.b16 %v193, %v191
      %v200 = vpack.c.b16 %v196, %v194
      %v201 = vpack.c.b16 %v197, %v195
      %vm206 = vcmask 261120
      %v208 = vsel %vm206, %v169, 0
      %210 = vmatprep.subr.bf16.mxu0 %v199
      %211 = vmatpush1.bf16.msra.mxu0 %v198
      %212 = vmatprep.subr.bf16.mxu0 %v201
      %213 = vmatpush1.bf16.msra.mxu0 %v200
      %214 = vmatprep.subr.bf16.mxu0 0
      %215 = vmatpush1.bf16.msra.mxu0 0
      %216 = vmatprep.subr.bf16.mxu0 0
      %217 = vmatpush1.bf16.msra.mxu0 0
      %218 = vmatprep.subr.bf16.mxu0 0
      %219 = vmatpush1.bf16.msra.mxu0 0
      %220 = vmatprep.subr.bf16.mxu0 0
      %221 = vmatpush1.bf16.msra.mxu0 0
      %222 = vmatprep.subr.bf16.mxu0 0
      %223 = vmatpush1.bf16.msra.mxu0 0
      %224 = vmatprep.subr.bf16.mxu0 0
      %225 = vmatpush1.bf16.msra.mxu0 0
      %226 = vmatprep.subr.bf16.mxu0 0
      %227 = vmatpush1.bf16.msra.mxu0 0
      %228 = vmatprep.subr.bf16.mxu0 0
      %229 = vmatpush1.bf16.msra.mxu0 0
      %230 = vmatprep.subr.bf16.mxu0 0
      %231 = vmatpush1.bf16.msra.mxu0 0
      %232 = vmatprep.subr.bf16.mxu0 0
      %233 = vmatpush1.bf16.msra.mxu0 0
      %234 = vmatprep.subr.bf16.mxu0 0
      %235 = vmatpush1.bf16.msra.mxu0 0
      %236 = vmatprep.subr.bf16.mxu0 0
      %237 = vmatpush1.bf16.msra.mxu0 0
      %238 = vmatprep.subr.bf16.mxu0 0
      %239 = vmatpush1.bf16.msra.mxu0 0
      %240 = vmatprep.subr.bf16.mxu0 0
      %241 = vmatpush1.bf16.msra.mxu0 0
      %242 = vmatprep.mubr.bf16.mxu0 0
      %243 = vmatmul.mubr.bf16.gmra.mrb[0].mxu0 %v208
      %v244 = vpop.f32.mrb[0].mxu0
      %v245 = vadd.f32 %v179, %v244
      %v246 = vpop.f32.mrb[0].mxu0
      %v247 = vadd.f32 %v183, %v246
      %v248 = vpop.f32.mrb[0].mxu0
      %v249 = vpop.f32.mrb[0].mxu0
      %250 = vdwg.mxu0
      %v251 = vmax.f32 %v245, %v247
      %252 = vmax.xlane.f32.xlu0 %v251
      %v253 = vpop.xlane.xlu0 %252
      %v254 = vsub.f32 %v245, %v253
      %v255 = vsub.f32 %v247, %v253
      %v256 = vmul.f32 %v254, 1.442695
      %v257 = vpow.pop %v256
      %v258 = vmul.f32 %v255, 1.442695
      %v259 = vpow.pop %v258
      %v260 = vadd.f32 %v257, %v259
      %261 = vadd.xlane.f32.xlu0 %v260
      %v262 = vpop.xlane.xlu0 %261
      %v263 = vlog2.pop %v262
      %v264 = vmul.f32 %v263, 0.6931472
      %v265 = vadd.f32 %v253, %v264
      %v266 = vsub.f32 %v245, %v265
      %v267 = vsub.f32 %v247, %v265
      %268 = vst [vmem:[%s167] sm:$0xff] %v266
      %269 = vst [vmem:[%s167 + $0x8] sm:$0xff] %v267
      %p270 = scmp.lt.s32.totalorder %s14, 1
      %s271 = scalar_select %p270, %s14, 1
      %s272 = smul.addr %s271, 2
      %s273 = smul.addr %s272, 8
      %s274 = scalar_lea.vmem %s3, %s273
      // Predicated region
      $region33: #{_ctc_head_forward_impl.1} parent=31 // pred_check
        %p275 = pneg %p100
      $region34: #{_ctc_head_forward_impl.1} parent=31 // pred_check_branch
        %277 = sbr.rel (%p275) target = $region36
      $region35: #{_ctc_head_forward_impl.1} parent=31 // pred_region
        _
      $region36: #{_ctc_head_forward_impl.1} parent=31 // pred_fallthru
        _
    $region32: #{_ctc_head_forward_impl.1} parent=5 // pred_fallthru
      _
    %p278 = scmp.le.s32.totalorder 2, %s9
    // Predicated region
    $region37: #{_ctc_head_forward_impl.1} parent=5 // pred_check
      %p279 = pneg %p278
    $region38: #{_ctc_head_forward_impl.1} parent=5 // pred_check_branch
      %281 = sbr.rel (%p279) target = $region40
    $region39: #{_ctc_head_forward_impl.1} parent=5 // pred_region
      %s282 = ssub.s32 %s9, 2
      // Predicated region
      $region41: #{_ctc_head_forward_impl.1} parent=39 // pred_check
        %p283 = pneg %p106
      $region42: #{_ctc_head_forward_impl.1} parent=39 // pred_check_branch
        %285 = sbr.rel (%p283) target = $region44
      $region43: #{_ctc_head_forward_impl.1} parent=39 // pred_region
        %p286 = scmp.lt.s32.totalorder %s15, 1
        %s287 = scalar_select %p286, %s15, 1
        %s288 = smul.addr %s287, 2
        %s289 = smul.addr %s288, 8
        %s290 = scalar_lea.vmem %s3, %s289
      $region44: #{_ctc_head_forward_impl.1} parent=39 // pred_fallthru
        _
    $region40: #{_ctc_head_forward_impl.1} parent=5 // pred_fallthru
      _
  $region6: #{_ctc_head_forward_impl.1} parent=0 // loop_footer
    %s13 = sadd.s32 1, %s9
  $region7: #{_ctc_head_forward_impl.1} parent=0 // loop_footer_branch
    %8 = sbr.rel target = $region3
  $region8: #{_ctc_head_forward_impl.1} parent=0 // loop_exit
    _

</llo_original>
